<compile_context>
chip_gen: v5e
topology: v5e:2x2
jax: 0.10.0
libtpu: 0.0.40
codegen_flags: <defaults>
</compile_context>

<pallas_src>
import numpy as np
import jax
import jax.numpy as jnp
from jax.experimental import pallas as pl
from jax.experimental.pallas import tpu as pltpu


NQ_PAD = 128  # bins padded to one full lane vector (nq <= 100 per the module)


def _make_ap_kernel(nq, a, minv, maxv, tile_n):
    """Builds the kernel with the quantizer constants baked in."""
    nqf = float(nq)
    a = float(a)
    maxv = float(maxv)
    del minv  # folded into a*(max - x)

    def kernel(x_ref, lbl_ref, ap_ref, cnbs_acc, crec_acc):
        m = pl.program_id(1)

        @pl.when(m == 0)
        def _init():
            cnbs_acc[...] = jnp.zeros_like(cnbs_acc)
            crec_acc[...] = jnp.zeros_like(crec_acc)

        x = x_ref[...]      # (tile_n, tile_m) f32
        lbl = lbl_ref[...]  # (tile_n, tile_m) f32 (0/1)

        # Reversed, scaled coordinate: u = a*(max - x) in [0, nq-1] for
        # in-range x; the clamp reproduces the PyTorch half-hat edge bins for
        # out-of-range values too.  Computed once per tile (shared by bins).
        u = (maxv - x) * a
        u = jnp.minimum(jnp.maximum(u, 0.0), nqf - 1.0)

        # Per-bin cumulative ramp, reduced immediately (no (N, nq, M) temps).
        cn_cols = []
        cr_cols = []
        for k in range(nq):          # Python-unrolled, nq is small (<=100)
            # sum_{k'<=k} hat_{k'}(x) == clamp(k + 1 - u, 0, 1)
            r = jnp.maximum(jnp.minimum((k + 1.0) - u, 1.0), 0.0)
            cn_cols.append(jnp.sum(r, axis=-1, keepdims=True))
            cr_cols.append(jnp.sum(r * lbl, axis=-1, keepdims=True))

        pad = jnp.zeros((tile_n, NQ_PAD - nq), jnp.float32)
        cnbs_acc[...] += jnp.concatenate(cn_cols + [pad], axis=-1)
        crec_acc[...] += jnp.concatenate(cr_cols + [pad], axis=-1)

        @pl.when(m == pl.num_programs(1) - 1)
        def _finalize():
            cnbs = cnbs_acc[...]     # (tile_n, 128) cumulative counts; zeros in lanes >= nq
            crec = crec_acc[...]     # (tile_n, 128) cumulative positives

            # prec_k = crec_k / (1e-16 + cnbs_k)  (padded lanes -> 0)
            prec = crec / (1e-16 + cnbs)

            # rec_k = crec_k - crec_{k-1}  (exact shift-and-subtract, no matmul).
            shifted = jnp.concatenate(
                [jnp.zeros((tile_n, 1), jnp.float32), crec[:, : NQ_PAD - 1]],
                axis=-1)
            rec = crec - shifted
            lane = jax.lax.broadcasted_iota(jnp.int32, (tile_n, NQ_PAD), 1)
            rec = jnp.where(lane < nq, rec, 0.0)

            # No epsilon on the recall normalization (matches the torch code):
            # a row with zero positive labels yields NaN AP, as in PyTorch.
            rec_sum = jnp.sum(rec, axis=-1, keepdims=True)
            ap = jnp.sum(prec * rec, axis=-1, keepdims=True) / rec_sum
            # Lane-dense (unmasked) store; wrapper reads column 0.
            ap_ref[...] = jnp.broadcast_to(ap, (tile_n, NQ_PAD))

    return kernel


def _pick_tile(total, candidates):
    for c in candidates:
        if c <= total and total % c == 0:
            return c
    return total


def ap_loss(x, label, nq=25, minv=0.0, maxv=1.0, qw=None, ret="1-mAP",
            tile_n=None, tile_m=None):
    """Pallas implementation of APLoss.forward."""
    assert x.shape == label.shape and x.ndim == 2
    assert isinstance(nq, int) and 2 <= nq <= 100
    N, M = x.shape
    gap = float(maxv) - float(minv)
    assert gap > 0
    a = (nq - 1) / gap

    if tile_n is None:
        tile_n = _pick_tile(N, (256, 128, 64, 32, 16, 8))
    if tile_m is None:
        # Kernel is compute-bound; modest tiles keep VMEM small at no cost.
        tile_m = _pick_tile(M, (1024, 2048, 512, 256, 128))
    assert N % tile_n == 0, (N, tile_n)
    assert M % tile_m == 0, (M, tile_m)

    x = x.astype(jnp.float32)
    lbl = label.astype(jnp.float32)

    grid = (N // tile_n, M // tile_m)
    kernel = _make_ap_kernel(nq, a, minv, maxv, tile_n)

    ap_pad = pl.pallas_call(
        kernel,
        out_shape=jax.ShapeDtypeStruct((N, NQ_PAD), jnp.float32),
        grid_spec=pltpu.PrefetchScalarGridSpec(
            num_scalar_prefetch=0,
            grid=grid,
            in_specs=[
                pl.BlockSpec((tile_n, tile_m), lambda i, m: (i, m)),
                pl.BlockSpec((tile_n, tile_m), lambda i, m: (i, m)),
            ],
            out_specs=pl.BlockSpec((tile_n, NQ_PAD), lambda i, m: (i, 0)),
            scratch_shapes=[
                pltpu.VMEM((tile_n, NQ_PAD), jnp.float32),  # cumulative nbs
                pltpu.VMEM((tile_n, NQ_PAD), jnp.float32),  # cumulative rec
            ],
        ),
        compiler_params=pltpu.CompilerParams(
            # N tiles independent (sharded across v7x's 2 TCs); M is reduction.
            dimension_semantics=("parallel", "arbitrary"),
        ),
    )(x, lbl)

    ap = ap_pad[:, 0]
    if ret == "1-mAP":
        if qw is not None:
            ap = ap * qw
        return 1.0 - jnp.mean(ap)
    elif ret == "AP":
        assert qw is None
        return ap
    else:
        raise ValueError("Bad return type for APLoss(): %s" % str(ret))


def ap_loss_ref(x, label, nq=25, minv=0.0, maxv=1.0):
    """Pure-JAX reference mirroring the PyTorch forward (Conv1d form)."""
    gap = maxv - minv
    a = (nq - 1) / gap
    w1 = np.full(nq, -a, dtype=np.float32)
    b1 = (a * minv + np.arange(nq, 0, -1)).astype(np.float32)
    w2 = np.full(nq, a, dtype=np.float32)
    b2 = (np.arange(2 - nq, 2, 1) - a * minv).astype(np.float32)
    w1[0] = 0.0
    b1[0] = 1.0
    w2[-1] = 0.0
    b2[-1] = 1.0

    x = x.astype(jnp.float32)
    lbl = label.astype(jnp.float32)
    q1 = w1[None, :, None] * x[:, None, :] + b1[None, :, None]
    q2 = w2[None, :, None] * x[:, None, :] + b2[None, :, None]
    q = jnp.maximum(jnp.minimum(q1, q2), 0.0)
    nbs = q.sum(-1)
    rec = (q * lbl[:, None, :]).sum(-1)
    prec = jnp.cumsum(rec, -1) / (1e-16 + jnp.cumsum(nbs, -1))
    rec_n = rec / rec.sum(-1, keepdims=True)
    ap = (prec * rec_n).sum(-1)
    return 1.0 - ap.mean()


if __name__ == "__main__":
    N, M, NQ = 16, 512, 25
    key = jax.random.PRNGKey(0)
    kx, kl = jax.random.split(key)
    x = jax.random.uniform(kx, (N, M), dtype=jnp.float32)           # values in [0, 1]
    label = (jax.random.uniform(kl, (N, M)) > 0.5).astype(jnp.float32)

    # Small explicit tiles so both grid axes (parallel N tiles, arbitrary M
    # reduction with scratch accumulation) are actually exercised.
    loss = ap_loss(x, label, nq=NQ, minv=0.0, maxv=1.0, tile_n=8, tile_m=256)
    loss = jax.block_until_ready(loss)

    ref = ap_loss_ref(x, label, nq=NQ, minv=0.0, maxv=1.0)
    np.testing.assert_allclose(np.asarray(loss), np.asarray(ref),
                               rtol=1e-5, atol=1e-5)

    print("KERNEL_OK")
</pallas_src>

<mosaic_0001>
module attributes {stable_mosaic.version = 11 : i64} {
  func.func @kernel(%arg0: i32, %arg1: i32, %arg2: memref<8x256xf32, #tpu.memory_space<vmem>>, %arg3: memref<8x256xf32, #tpu.memory_space<vmem>>, %arg4: memref<8x128xf32, #tpu.memory_space<vmem>>, %arg5: memref<8x128xf32, #tpu.memory_space<vmem>>, %arg6: memref<8x128xf32, #tpu.memory_space<vmem>>) attributes {dimension_semantics = [#tpu.dimension_semantics<parallel>, #tpu.dimension_semantics<arbitrary>], iteration_bounds = array<i64: 2, 2>, scalar_prefetch = 0 : i64, scratch_operands = 2 : i64, tpu.core_type = #tpu.core_type<tc>, window_params = [{transform_indices = @transform_0, window_bounds = array<i64: 8, 256>}, {transform_indices = @transform_1, window_bounds = array<i64: 8, 256>}, {transform_indices = @transform_2, window_bounds = array<i64: 8, 128>}]} {
    %c0_i32 = arith.constant 0 : i32
    %0 = arith.cmpi eq, %arg1, %c0_i32 : i32
    %1 = arith.extui %0 : i1 to i32
    %c0_i32_0 = arith.constant 0 : i32
    %2 = arith.cmpi ne, %1, %c0_i32_0 : i32
    scf.if %2 {
      %cst_142 = arith.constant 0.000000e+00 : f32
      %304 = vector.broadcast %cst_142 : f32 to vector<8x128xf32>
      %c0_143 = arith.constant 0 : index
      %c0_144 = arith.constant 0 : index
      %305 = vector.load %arg5[%c0_143, %c0_144] : memref<8x128xf32, #tpu.memory_space<vmem>>, vector<8x128xf32>
      tpu.vector_store %arg5[%c0_143, %c0_144], %304 {strides = array<i32>} : memref<8x128xf32, #tpu.memory_space<vmem>>, vector<8x128xf32>,
      %cst_145 = arith.constant 0.000000e+00 : f32
      %306 = vector.broadcast %cst_145 : f32 to vector<8x128xf32>
      %c0_146 = arith.constant 0 : index
      %c0_147 = arith.constant 0 : index
      %307 = vector.load %arg6[%c0_146, %c0_147] : memref<8x128xf32, #tpu.memory_space<vmem>>, vector<8x128xf32>
      tpu.vector_store %arg6[%c0_146, %c0_147], %306 {strides = array<i32>} : memref<8x128xf32, #tpu.memory_space<vmem>>, vector<8x128xf32>,
    } else {
    }
    %c0 = arith.constant 0 : index
    %c0_1 = arith.constant 0 : index
    %3 = vector.load %arg2[%c0, %c0_1] : memref<8x256xf32, #tpu.memory_space<vmem>>, vector<8x256xf32>
    %c0_2 = arith.constant 0 : index
    %c0_3 = arith.constant 0 : index
    %4 = vector.load %arg3[%c0_2, %c0_3] : memref<8x256xf32, #tpu.memory_space<vmem>>, vector<8x256xf32>
    %cst = arith.constant 1.000000e+00 : f32
    %5 = vector.broadcast %cst : f32 to vector<8x256xf32>
    %6 = arith.subf %5, %3 : vector<8x256xf32>
    %cst_4 = arith.constant 2.400000e+01 : f32
    %7 = vector.broadcast %cst_4 : f32 to vector<8x256xf32>
    %8 = arith.mulf %6, %7 : vector<8x256xf32>
    %cst_5 = arith.constant 0.000000e+00 : f32
    %9 = vector.broadcast %cst_5 : f32 to vector<8x256xf32>
    %10 = arith.maximumf %8, %9 : vector<8x256xf32>
    %cst_6 = arith.constant 2.400000e+01 : f32
    %11 = vector.broadcast %cst_6 : f32 to vector<8x256xf32>
    %12 = arith.minimumf %10, %11 : vector<8x256xf32>
    %cst_7 = arith.constant 1.000000e+00 : f32
    %13 = vector.broadcast %cst_7 : f32 to vector<8x256xf32>
    %14 = arith.subf %13, %12 : vector<8x256xf32>
    %cst_8 = arith.constant 1.000000e+00 : f32
    %15 = vector.broadcast %cst_8 : f32 to vector<8x256xf32>
    %16 = arith.minimumf %14, %15 : vector<8x256xf32>
    %cst_9 = arith.constant 0.000000e+00 : f32
    %17 = vector.broadcast %cst_9 : f32 to vector<8x256xf32>
    %18 = arith.maximumf %16, %17 : vector<8x256xf32>
    %cst_10 = arith.constant dense<0.000000e+00> : vector<8xf32>
    %19 = vector.multi_reduction <add>, %18, %cst_10 [1] : vector<8x256xf32> to vector<8xf32>
    %20 = vector.shape_cast %19 : vector<8xf32> to vector<8x1xf32>
    %21 = arith.mulf %18, %4 : vector<8x256xf32>
    %cst_11 = arith.constant dense<0.000000e+00> : vector<8xf32>
    %22 = vector.multi_reduction <add>, %21, %cst_11 [1] : vector<8x256xf32> to vector<8xf32>
    %23 = vector.shape_cast %22 : vector<8xf32> to vector<8x1xf32>
    %cst_12 = arith.constant 2.000000e+00 : f32
    %24 = vector.broadcast %cst_12 : f32 to vector<8x256xf32>
    %25 = arith.subf %24, %12 : vector<8x256xf32>
    %cst_13 = arith.constant 1.000000e+00 : f32
    %26 = vector.broadcast %cst_13 : f32 to vector<8x256xf32>
    %27 = arith.minimumf %25, %26 : vector<8x256xf32>
    %cst_14 = arith.constant 0.000000e+00 : f32
    %28 = vector.broadcast %cst_14 : f32 to vector<8x256xf32>
    %29 = arith.maximumf %27, %28 : vector<8x256xf32>
    %cst_15 = arith.constant dense<0.000000e+00> : vector<8xf32>
    %30 = vector.multi_reduction <add>, %29, %cst_15 [1] : vector<8x256xf32> to vector<8xf32>
    %31 = vector.shape_cast %30 : vector<8xf32> to vector<8x1xf32>
    %32 = arith.mulf %29, %4 : vector<8x256xf32>
    %cst_16 = arith.constant dense<0.000000e+00> : vector<8xf32>
    %33 = vector.multi_reduction <add>, %32, %cst_16 [1] : vector<8x256xf32> to vector<8xf32>
    %34 = vector.shape_cast %33 : vector<8xf32> to vector<8x1xf32>
    %cst_17 = arith.constant 3.000000e+00 : f32
    %35 = vector.broadcast %cst_17 : f32 to vector<8x256xf32>
    %36 = arith.subf %35, %12 : vector<8x256xf32>
    %cst_18 = arith.constant 1.000000e+00 : f32
    %37 = vector.broadcast %cst_18 : f32 to vector<8x256xf32>
    %38 = arith.minimumf %36, %37 : vector<8x256xf32>
    %cst_19 = arith.constant 0.000000e+00 : f32
    %39 = vector.broadcast %cst_19 : f32 to vector<8x256xf32>
    %40 = arith.maximumf %38, %39 : vector<8x256xf32>
    %cst_20 = arith.constant dense<0.000000e+00> : vector<8xf32>
    %41 = vector.multi_reduction <add>, %40, %cst_20 [1] : vector<8x256xf32> to vector<8xf32>
    %42 = vector.shape_cast %41 : vector<8xf32> to vector<8x1xf32>
    %43 = arith.mulf %40, %4 : vector<8x256xf32>
    %cst_21 = arith.constant dense<0.000000e+00> : vector<8xf32>
    %44 = vector.multi_reduction <add>, %43, %cst_21 [1] : vector<8x256xf32> to vector<8xf32>
    %45 = vector.shape_cast %44 : vector<8xf32> to vector<8x1xf32>
    %cst_22 = arith.constant 4.000000e+00 : f32
    %46 = vector.broadcast %cst_22 : f32 to vector<8x256xf32>
    %47 = arith.subf %46, %12 : vector<8x256xf32>
    %cst_23 = arith.constant 1.000000e+00 : f32
    %48 = vector.broadcast %cst_23 : f32 to vector<8x256xf32>
    %49 = arith.minimumf %47, %48 : vector<8x256xf32>
    %cst_24 = arith.constant 0.000000e+00 : f32
    %50 = vector.broadcast %cst_24 : f32 to vector<8x256xf32>
    %51 = arith.maximumf %49, %50 : vector<8x256xf32>
    %cst_25 = arith.constant dense<0.000000e+00> : vector<8xf32>
    %52 = vector.multi_reduction <add>, %51, %cst_25 [1] : vector<8x256xf32> to vector<8xf32>
    %53 = vector.shape_cast %52 : vector<8xf32> to vector<8x1xf32>
    %54 = arith.mulf %51, %4 : vector<8x256xf32>
    %cst_26 = arith.constant dense<0.000000e+00> : vector<8xf32>
    %55 = vector.multi_reduction <add>, %54, %cst_26 [1] : vector<8x256xf32> to vector<8xf32>
    %56 = vector.shape_cast %55 : vector<8xf32> to vector<8x1xf32>
    %cst_27 = arith.constant 5.000000e+00 : f32
    %57 = vector.broadcast %cst_27 : f32 to vector<8x256xf32>
    %58 = arith.subf %57, %12 : vector<8x256xf32>
    %cst_28 = arith.constant 1.000000e+00 : f32
    %59 = vector.broadcast %cst_28 : f32 to vector<8x256xf32>
    %60 = arith.minimumf %58, %59 : vector<8x256xf32>
    %cst_29 = arith.constant 0.000000e+00 : f32
    %61 = vector.broadcast %cst_29 : f32 to vector<8x256xf32>
    %62 = arith.maximumf %60, %61 : vector<8x256xf32>
    %cst_30 = arith.constant dense<0.000000e+00> : vector<8xf32>
    %63 = vector.multi_reduction <add>, %62, %cst_30 [1] : vector<8x256xf32> to vector<8xf32>
    %64 = vector.shape_cast %63 : vector<8xf32> to vector<8x1xf32>
    %65 = arith.mulf %62, %4 : vector<8x256xf32>
    %cst_31 = arith.constant dense<0.000000e+00> : vector<8xf32>
    %66 = vector.multi_reduction <add>, %65, %cst_31 [1] : vector<8x256xf32> to vector<8xf32>
    %67 = vector.shape_cast %66 : vector<8xf32> to vector<8x1xf32>
    %cst_32 = arith.constant 6.000000e+00 : f32
    %68 = vector.broadcast %cst_32 : f32 to vector<8x256xf32>
    %69 = arith.subf %68, %12 : vector<8x256xf32>
    %cst_33 = arith.constant 1.000000e+00 : f32
    %70 = vector.broadcast %cst_33 : f32 to vector<8x256xf32>
    %71 = arith.minimumf %69, %70 : vector<8x256xf32>
    %cst_34 = arith.constant 0.000000e+00 : f32
    %72 = vector.broadcast %cst_34 : f32 to vector<8x256xf32>
    %73 = arith.maximumf %71, %72 : vector<8x256xf32>
    %cst_35 = arith.constant dense<0.000000e+00> : vector<8xf32>
    %74 = vector.multi_reduction <add>, %73, %cst_35 [1] : vector<8x256xf32> to vector<8xf32>
    %75 = vector.shape_cast %74 : vector<8xf32> to vector<8x1xf32>
    %76 = arith.mulf %73, %4 : vector<8x256xf32>
    %cst_36 = arith.constant dense<0.000000e+00> : vector<8xf32>
    %77 = vector.multi_reduction <add>, %76, %cst_36 [1] : vector<8x256xf32> to vector<8xf32>
    %78 = vector.shape_cast %77 : vector<8xf32> to vector<8x1xf32>
    %cst_37 = arith.constant 7.000000e+00 : f32
    %79 = vector.broadcast %cst_37 : f32 to vector<8x256xf32>
    %80 = arith.subf %79, %12 : vector<8x256xf32>
    %cst_38 = arith.constant 1.000000e+00 : f32
    %81 = vector.broadcast %cst_38 : f32 to vector<8x256xf32>
    %82 = arith.minimumf %80, %81 : vector<8x256xf32>
    %cst_39 = arith.constant 0.000000e+00 : f32
    %83 = vector.broadcast %cst_39 : f32 to vector<8x256xf32>
    %84 = arith.maximumf %82, %83 : vector<8x256xf32>
    %cst_40 = arith.constant dense<0.000000e+00> : vector<8xf32>
    %85 = vector.multi_reduction <add>, %84, %cst_40 [1] : vector<8x256xf32> to vector<8xf32>
    %86 = vector.shape_cast %85 : vector<8xf32> to vector<8x1xf32>
    %87 = arith.mulf %84, %4 : vector<8x256xf32>
    %cst_41 = arith.constant dense<0.000000e+00> : vector<8xf32>
    %88 = vector.multi_reduction <add>, %87, %cst_41 [1] : vector<8x256xf32> to vector<8xf32>
    %89 = vector.shape_cast %88 : vector<8xf32> to vector<8x1xf32>
    %cst_42 = arith.constant 8.000000e+00 : f32
    %90 = vector.broadcast %cst_42 : f32 to vector<8x256xf32>
    %91 = arith.subf %90, %12 : vector<8x256xf32>
    %cst_43 = arith.constant 1.000000e+00 : f32
    %92 = vector.broadcast %cst_43 : f32 to vector<8x256xf32>
    %93 = arith.minimumf %91, %92 : vector<8x256xf32>
    %cst_44 = arith.constant 0.000000e+00 : f32
    %94 = vector.broadcast %cst_44 : f32 to vector<8x256xf32>
    %95 = arith.maximumf %93, %94 : vector<8x256xf32>
    %cst_45 = arith.constant dense<0.000000e+00> : vector<8xf32>
    %96 = vector.multi_reduction <add>, %95, %cst_45 [1] : vector<8x256xf32> to vector<8xf32>
    %97 = vector.shape_cast %96 : vector<8xf32> to vector<8x1xf32>
    %98 = arith.mulf %95, %4 : vector<8x256xf32>
    %cst_46 = arith.constant dense<0.000000e+00> : vector<8xf32>
    %99 = vector.multi_reduction <add>, %98, %cst_46 [1] : vector<8x256xf32> to vector<8xf32>
    %100 = vector.shape_cast %99 : vector<8xf32> to vector<8x1xf32>
    %cst_47 = arith.constant 9.000000e+00 : f32
    %101 = vector.broadcast %cst_47 : f32 to vector<8x256xf32>
    %102 = arith.subf %101, %12 : vector<8x256xf32>
    %cst_48 = arith.constant 1.000000e+00 : f32
    %103 = vector.broadcast %cst_48 : f32 to vector<8x256xf32>
    %104 = arith.minimumf %102, %103 : vector<8x256xf32>
    %cst_49 = arith.constant 0.000000e+00 : f32
    %105 = vector.broadcast %cst_49 : f32 to vector<8x256xf32>
    %106 = arith.maximumf %104, %105 : vector<8x256xf32>
    %cst_50 = arith.constant dense<0.000000e+00> : vector<8xf32>
    %107 = vector.multi_reduction <add>, %106, %cst_50 [1] : vector<8x256xf32> to vector<8xf32>
    %108 = vector.shape_cast %107 : vector<8xf32> to vector<8x1xf32>
    %109 = arith.mulf %106, %4 : vector<8x256xf32>
    %cst_51 = arith.constant dense<0.000000e+00> : vector<8xf32>
    %110 = vector.multi_reduction <add>, %109, %cst_51 [1] : vector<8x256xf32> to vector<8xf32>
    %111 = vector.shape_cast %110 : vector<8xf32> to vector<8x1xf32>
    %cst_52 = arith.constant 1.000000e+01 : f32
    %112 = vector.broadcast %cst_52 : f32 to vector<8x256xf32>
    %113 = arith.subf %112, %12 : vector<8x256xf32>
    %cst_53 = arith.constant 1.000000e+00 : f32
    %114 = vector.broadcast %cst_53 : f32 to vector<8x256xf32>
    %115 = arith.minimumf %113, %114 : vector<8x256xf32>
    %cst_54 = arith.constant 0.000000e+00 : f32
    %116 = vector.broadcast %cst_54 : f32 to vector<8x256xf32>
    %117 = arith.maximumf %115, %116 : vector<8x256xf32>
    %cst_55 = arith.constant dense<0.000000e+00> : vector<8xf32>
    %118 = vector.multi_reduction <add>, %117, %cst_55 [1] : vector<8x256xf32> to vector<8xf32>
    %119 = vector.shape_cast %118 : vector<8xf32> to vector<8x1xf32>
    %120 = arith.mulf %117, %4 : vector<8x256xf32>
    %cst_56 = arith.constant dense<0.000000e+00> : vector<8xf32>
    %121 = vector.multi_reduction <add>, %120, %cst_56 [1] : vector<8x256xf32> to vector<8xf32>
    %122 = vector.shape_cast %121 : vector<8xf32> to vector<8x1xf32>
    %cst_57 = arith.constant 1.100000e+01 : f32
    %123 = vector.broadcast %cst_57 : f32 to vector<8x256xf32>
    %124 = arith.subf %123, %12 : vector<8x256xf32>
    %cst_58 = arith.constant 1.000000e+00 : f32
    %125 = vector.broadcast %cst_58 : f32 to vector<8x256xf32>
    %126 = arith.minimumf %124, %125 : vector<8x256xf32>
    %cst_59 = arith.constant 0.000000e+00 : f32
    %127 = vector.broadcast %cst_59 : f32 to vector<8x256xf32>
    %128 = arith.maximumf %126, %127 : vector<8x256xf32>
    %cst_60 = arith.constant dense<0.000000e+00> : vector<8xf32>
    %129 = vector.multi_reduction <add>, %128, %cst_60 [1] : vector<8x256xf32> to vector<8xf32>
    %130 = vector.shape_cast %129 : vector<8xf32> to vector<8x1xf32>
    %131 = arith.mulf %128, %4 : vector<8x256xf32>
    %cst_61 = arith.constant dense<0.000000e+00> : vector<8xf32>
    %132 = vector.multi_reduction <add>, %131, %cst_61 [1] : vector<8x256xf32> to vector<8xf32>
    %133 = vector.shape_cast %132 : vector<8xf32> to vector<8x1xf32>
    %cst_62 = arith.constant 1.200000e+01 : f32
    %134 = vector.broadcast %cst_62 : f32 to vector<8x256xf32>
    %135 = arith.subf %134, %12 : vector<8x256xf32>
    %cst_63 = arith.constant 1.000000e+00 : f32
    %136 = vector.broadcast %cst_63 : f32 to vector<8x256xf32>
    %137 = arith.minimumf %135, %136 : vector<8x256xf32>
    %cst_64 = arith.constant 0.000000e+00 : f32
    %138 = vector.broadcast %cst_64 : f32 to vector<8x256xf32>
    %139 = arith.maximumf %137, %138 : vector<8x256xf32>
    %cst_65 = arith.constant dense<0.000000e+00> : vector<8xf32>
    %140 = vector.multi_reduction <add>, %139, %cst_65 [1] : vector<8x256xf32> to vector<8xf32>
    %141 = vector.shape_cast %140 : vector<8xf32> to vector<8x1xf32>
    %142 = arith.mulf %139, %4 : vector<8x256xf32>
    %cst_66 = arith.constant dense<0.000000e+00> : vector<8xf32>
    %143 = vector.multi_reduction <add>, %142, %cst_66 [1] : vector<8x256xf32> to vector<8xf32>
    %144 = vector.shape_cast %143 : vector<8xf32> to vector<8x1xf32>
    %cst_67 = arith.constant 1.300000e+01 : f32
    %145 = vector.broadcast %cst_67 : f32 to vector<8x256xf32>
    %146 = arith.subf %145, %12 : vector<8x256xf32>
    %cst_68 = arith.constant 1.000000e+00 : f32
    %147 = vector.broadcast %cst_68 : f32 to vector<8x256xf32>
    %148 = arith.minimumf %146, %147 : vector<8x256xf32>
    %cst_69 = arith.constant 0.000000e+00 : f32
    %149 = vector.broadcast %cst_69 : f32 to vector<8x256xf32>
    %150 = arith.maximumf %148, %149 : vector<8x256xf32>
    %cst_70 = arith.constant dense<0.000000e+00> : vector<8xf32>
    %151 = vector.multi_reduction <add>, %150, %cst_70 [1] : vector<8x256xf32> to vector<8xf32>
    %152 = vector.shape_cast %151 : vector<8xf32> to vector<8x1xf32>
    %153 = arith.mulf %150, %4 : vector<8x256xf32>
    %cst_71 = arith.constant dense<0.000000e+00> : vector<8xf32>
    %154 = vector.multi_reduction <add>, %153, %cst_71 [1] : vector<8x256xf32> to vector<8xf32>
    %155 = vector.shape_cast %154 : vector<8xf32> to vector<8x1xf32>
    %cst_72 = arith.constant 1.400000e+01 : f32
    %156 = vector.broadcast %cst_72 : f32 to vector<8x256xf32>
    %157 = arith.subf %156, %12 : vector<8x256xf32>
    %cst_73 = arith.constant 1.000000e+00 : f32
    %158 = vector.broadcast %cst_73 : f32 to vector<8x256xf32>
    %159 = arith.minimumf %157, %158 : vector<8x256xf32>
    %cst_74 = arith.constant 0.000000e+00 : f32
    %160 = vector.broadcast %cst_74 : f32 to vector<8x256xf32>
    %161 = arith.maximumf %159, %160 : vector<8x256xf32>
    %cst_75 = arith.constant dense<0.000000e+00> : vector<8xf32>
    %162 = vector.multi_reduction <add>, %161, %cst_75 [1] : vector<8x256xf32> to vector<8xf32>
    %163 = vector.shape_cast %162 : vector<8xf32> to vector<8x1xf32>
    %164 = arith.mulf %161, %4 : vector<8x256xf32>
    %cst_76 = arith.constant dense<0.000000e+00> : vector<8xf32>
    %165 = vector.multi_reduction <add>, %164, %cst_76 [1] : vector<8x256xf32> to vector<8xf32>
    %166 = vector.shape_cast %165 : vector<8xf32> to vector<8x1xf32>
    %cst_77 = arith.constant 1.500000e+01 : f32
    %167 = vector.broadcast %cst_77 : f32 to vector<8x256xf32>
    %168 = arith.subf %167, %12 : vector<8x256xf32>
    %cst_78 = arith.constant 1.000000e+00 : f32
    %169 = vector.broadcast %cst_78 : f32 to vector<8x256xf32>
    %170 = arith.minimumf %168, %169 : vector<8x256xf32>
    %cst_79 = arith.constant 0.000000e+00 : f32
    %171 = vector.broadcast %cst_79 : f32 to vector<8x256xf32>
    %172 = arith.maximumf %170, %171 : vector<8x256xf32>
    %cst_80 = arith.constant dense<0.000000e+00> : vector<8xf32>
    %173 = vector.multi_reduction <add>, %172, %cst_80 [1] : vector<8x256xf32> to vector<8xf32>
    %174 = vector.shape_cast %173 : vector<8xf32> to vector<8x1xf32>
    %175 = arith.mulf %172, %4 : vector<8x256xf32>
    %cst_81 = arith.constant dense<0.000000e+00> : vector<8xf32>
    %176 = vector.multi_reduction <add>, %175, %cst_81 [1] : vector<8x256xf32> to vector<8xf32>
    %177 = vector.shape_cast %176 : vector<8xf32> to vector<8x1xf32>
    %cst_82 = arith.constant 1.600000e+01 : f32
    %178 = vector.broadcast %cst_82 : f32 to vector<8x256xf32>
    %179 = arith.subf %178, %12 : vector<8x256xf32>
    %cst_83 = arith.constant 1.000000e+00 : f32
    %180 = vector.broadcast %cst_83 : f32 to vector<8x256xf32>
    %181 = arith.minimumf %179, %180 : vector<8x256xf32>
    %cst_84 = arith.constant 0.000000e+00 : f32
    %182 = vector.broadcast %cst_84 : f32 to vector<8x256xf32>
    %183 = arith.maximumf %181, %182 : vector<8x256xf32>
    %cst_85 = arith.constant dense<0.000000e+00> : vector<8xf32>
    %184 = vector.multi_reduction <add>, %183, %cst_85 [1] : vector<8x256xf32> to vector<8xf32>
    %185 = vector.shape_cast %184 : vector<8xf32> to vector<8x1xf32>
    %186 = arith.mulf %183, %4 : vector<8x256xf32>
    %cst_86 = arith.constant dense<0.000000e+00> : vector<8xf32>
    %187 = vector.multi_reduction <add>, %186, %cst_86 [1] : vector<8x256xf32> to vector<8xf32>
    %188 = vector.shape_cast %187 : vector<8xf32> to vector<8x1xf32>
    %cst_87 = arith.constant 1.700000e+01 : f32
    %189 = vector.broadcast %cst_87 : f32 to vector<8x256xf32>
    %190 = arith.subf %189, %12 : vector<8x256xf32>
    %cst_88 = arith.constant 1.000000e+00 : f32
    %191 = vector.broadcast %cst_88 : f32 to vector<8x256xf32>
    %192 = arith.minimumf %190, %191 : vector<8x256xf32>
    %cst_89 = arith.constant 0.000000e+00 : f32
    %193 = vector.broadcast %cst_89 : f32 to vector<8x256xf32>
    %194 = arith.maximumf %192, %193 : vector<8x256xf32>
    %cst_90 = arith.constant dense<0.000000e+00> : vector<8xf32>
    %195 = vector.multi_reduction <add>, %194, %cst_90 [1] : vector<8x256xf32> to vector<8xf32>
    %196 = vector.shape_cast %195 : vector<8xf32> to vector<8x1xf32>
    %197 = arith.mulf %194, %4 : vector<8x256xf32>
    %cst_91 = arith.constant dense<0.000000e+00> : vector<8xf32>
    %198 = vector.multi_reduction <add>, %197, %cst_91 [1] : vector<8x256xf32> to vector<8xf32>
    %199 = vector.shape_cast %198 : vector<8xf32> to vector<8x1xf32>
    %cst_92 = arith.constant 1.800000e+01 : f32
    %200 = vector.broadcast %cst_92 : f32 to vector<8x256xf32>
    %201 = arith.subf %200, %12 : vector<8x256xf32>
    %cst_93 = arith.constant 1.000000e+00 : f32
    %202 = vector.broadcast %cst_93 : f32 to vector<8x256xf32>
    %203 = arith.minimumf %201, %202 : vector<8x256xf32>
    %cst_94 = arith.constant 0.000000e+00 : f32
    %204 = vector.broadcast %cst_94 : f32 to vector<8x256xf32>
    %205 = arith.maximumf %203, %204 : vector<8x256xf32>
    %cst_95 = arith.constant dense<0.000000e+00> : vector<8xf32>
    %206 = vector.multi_reduction <add>, %205, %cst_95 [1] : vector<8x256xf32> to vector<8xf32>
    %207 = vector.shape_cast %206 : vector<8xf32> to vector<8x1xf32>
    %208 = arith.mulf %205, %4 : vector<8x256xf32>
    %cst_96 = arith.constant dense<0.000000e+00> : vector<8xf32>
    %209 = vector.multi_reduction <add>, %208, %cst_96 [1] : vector<8x256xf32> to vector<8xf32>
    %210 = vector.shape_cast %209 : vector<8xf32> to vector<8x1xf32>
    %cst_97 = arith.constant 1.900000e+01 : f32
    %211 = vector.broadcast %cst_97 : f32 to vector<8x256xf32>
    %212 = arith.subf %211, %12 : vector<8x256xf32>
    %cst_98 = arith.constant 1.000000e+00 : f32
    %213 = vector.broadcast %cst_98 : f32 to vector<8x256xf32>
    %214 = arith.minimumf %212, %213 : vector<8x256xf32>
    %cst_99 = arith.constant 0.000000e+00 : f32
    %215 = vector.broadcast %cst_99 : f32 to vector<8x256xf32>
    %216 = arith.maximumf %214, %215 : vector<8x256xf32>
    %cst_100 = arith.constant dense<0.000000e+00> : vector<8xf32>
    %217 = vector.multi_reduction <add>, %216, %cst_100 [1] : vector<8x256xf32> to vector<8xf32>
    %218 = vector.shape_cast %217 : vector<8xf32> to vector<8x1xf32>
    %219 = arith.mulf %216, %4 : vector<8x256xf32>
    %cst_101 = arith.constant dense<0.000000e+00> : vector<8xf32>
    %220 = vector.multi_reduction <add>, %219, %cst_101 [1] : vector<8x256xf32> to vector<8xf32>
    %221 = vector.shape_cast %220 : vector<8xf32> to vector<8x1xf32>
    %cst_102 = arith.constant 2.000000e+01 : f32
    %222 = vector.broadcast %cst_102 : f32 to vector<8x256xf32>
    %223 = arith.subf %222, %12 : vector<8x256xf32>
    %cst_103 = arith.constant 1.000000e+00 : f32
    %224 = vector.broadcast %cst_103 : f32 to vector<8x256xf32>
    %225 = arith.minimumf %223, %224 : vector<8x256xf32>
    %cst_104 = arith.constant 0.000000e+00 : f32
    %226 = vector.broadcast %cst_104 : f32 to vector<8x256xf32>
    %227 = arith.maximumf %225, %226 : vector<8x256xf32>
    %cst_105 = arith.constant dense<0.000000e+00> : vector<8xf32>
    %228 = vector.multi_reduction <add>, %227, %cst_105 [1] : vector<8x256xf32> to vector<8xf32>
    %229 = vector.shape_cast %228 : vector<8xf32> to vector<8x1xf32>
    %230 = arith.mulf %227, %4 : vector<8x256xf32>
    %cst_106 = arith.constant dense<0.000000e+00> : vector<8xf32>
    %231 = vector.multi_reduction <add>, %230, %cst_106 [1] : vector<8x256xf32> to vector<8xf32>
    %232 = vector.shape_cast %231 : vector<8xf32> to vector<8x1xf32>
    %cst_107 = arith.constant 2.100000e+01 : f32
    %233 = vector.broadcast %cst_107 : f32 to vector<8x256xf32>
    %234 = arith.subf %233, %12 : vector<8x256xf32>
    %cst_108 = arith.constant 1.000000e+00 : f32
    %235 = vector.broadcast %cst_108 : f32 to vector<8x256xf32>
    %236 = arith.minimumf %234, %235 : vector<8x256xf32>
    %cst_109 = arith.constant 0.000000e+00 : f32
    %237 = vector.broadcast %cst_109 : f32 to vector<8x256xf32>
    %238 = arith.maximumf %236, %237 : vector<8x256xf32>
    %cst_110 = arith.constant dense<0.000000e+00> : vector<8xf32>
    %239 = vector.multi_reduction <add>, %238, %cst_110 [1] : vector<8x256xf32> to vector<8xf32>
    %240 = vector.shape_cast %239 : vector<8xf32> to vector<8x1xf32>
    %241 = arith.mulf %238, %4 : vector<8x256xf32>
    %cst_111 = arith.constant dense<0.000000e+00> : vector<8xf32>
    %242 = vector.multi_reduction <add>, %241, %cst_111 [1] : vector<8x256xf32> to vector<8xf32>
    %243 = vector.shape_cast %242 : vector<8xf32> to vector<8x1xf32>
    %cst_112 = arith.constant 2.200000e+01 : f32
    %244 = vector.broadcast %cst_112 : f32 to vector<8x256xf32>
    %245 = arith.subf %244, %12 : vector<8x256xf32>
    %cst_113 = arith.constant 1.000000e+00 : f32
    %246 = vector.broadcast %cst_113 : f32 to vector<8x256xf32>
    %247 = arith.minimumf %245, %246 : vector<8x256xf32>
    %cst_114 = arith.constant 0.000000e+00 : f32
    %248 = vector.broadcast %cst_114 : f32 to vector<8x256xf32>
    %249 = arith.maximumf %247, %248 : vector<8x256xf32>
    %cst_115 = arith.constant dense<0.000000e+00> : vector<8xf32>
    %250 = vector.multi_reduction <add>, %249, %cst_115 [1] : vector<8x256xf32> to vector<8xf32>
    %251 = vector.shape_cast %250 : vector<8xf32> to vector<8x1xf32>
    %252 = arith.mulf %249, %4 : vector<8x256xf32>
    %cst_116 = arith.constant dense<0.000000e+00> : vector<8xf32>
    %253 = vector.multi_reduction <add>, %252, %cst_116 [1] : vector<8x256xf32> to vector<8xf32>
    %254 = vector.shape_cast %253 : vector<8xf32> to vector<8x1xf32>
    %cst_117 = arith.constant 2.300000e+01 : f32
    %255 = vector.broadcast %cst_117 : f32 to vector<8x256xf32>
    %256 = arith.subf %255, %12 : vector<8x256xf32>
    %cst_118 = arith.constant 1.000000e+00 : f32
    %257 = vector.broadcast %cst_118 : f32 to vector<8x256xf32>
    %258 = arith.minimumf %256, %257 : vector<8x256xf32>
    %cst_119 = arith.constant 0.000000e+00 : f32
    %259 = vector.broadcast %cst_119 : f32 to vector<8x256xf32>
    %260 = arith.maximumf %258, %259 : vector<8x256xf32>
    %cst_120 = arith.constant dense<0.000000e+00> : vector<8xf32>
    %261 = vector.multi_reduction <add>, %260, %cst_120 [1] : vector<8x256xf32> to vector<8xf32>
    %262 = vector.shape_cast %261 : vector<8xf32> to vector<8x1xf32>
    %263 = arith.mulf %260, %4 : vector<8x256xf32>
    %cst_121 = arith.constant dense<0.000000e+00> : vector<8xf32>
    %264 = vector.multi_reduction <add>, %263, %cst_121 [1] : vector<8x256xf32> to vector<8xf32>
    %265 = vector.shape_cast %264 : vector<8xf32> to vector<8x1xf32>
    %cst_122 = arith.constant 2.400000e+01 : f32
    %266 = vector.broadcast %cst_122 : f32 to vector<8x256xf32>
    %267 = arith.subf %266, %12 : vector<8x256xf32>
    %cst_123 = arith.constant 1.000000e+00 : f32
    %268 = vector.broadcast %cst_123 : f32 to vector<8x256xf32>
    %269 = arith.minimumf %267, %268 : vector<8x256xf32>
    %cst_124 = arith.constant 0.000000e+00 : f32
    %270 = vector.broadcast %cst_124 : f32 to vector<8x256xf32>
    %271 = arith.maximumf %269, %270 : vector<8x256xf32>
    %cst_125 = arith.constant dense<0.000000e+00> : vector<8xf32>
    %272 = vector.multi_reduction <add>, %271, %cst_125 [1] : vector<8x256xf32> to vector<8xf32>
    %273 = vector.shape_cast %272 : vector<8xf32> to vector<8x1xf32>
    %274 = arith.mulf %271, %4 : vector<8x256xf32>
    %cst_126 = arith.constant dense<0.000000e+00> : vector<8xf32>
    %275 = vector.multi_reduction <add>, %274, %cst_126 [1] : vector<8x256xf32> to vector<8xf32>
    %276 = vector.shape_cast %275 : vector<8xf32> to vector<8x1xf32>
    %cst_127 = arith.constant 2.500000e+01 : f32
    %277 = vector.broadcast %cst_127 : f32 to vector<8x256xf32>
    %278 = arith.subf %277, %12 : vector<8x256xf32>
    %cst_128 = arith.constant 1.000000e+00 : f32
    %279 = vector.broadcast %cst_128 : f32 to vector<8x256xf32>
    %280 = arith.minimumf %278, %279 : vector<8x256xf32>
    %cst_129 = arith.constant 0.000000e+00 : f32
    %281 = vector.broadcast %cst_129 : f32 to vector<8x256xf32>
    %282 = arith.maximumf %280, %281 : vector<8x256xf32>
    %cst_130 = arith.constant dense<0.000000e+00> : vector<8xf32>
    %283 = vector.multi_reduction <add>, %282, %cst_130 [1] : vector<8x256xf32> to vector<8xf32>
    %284 = vector.shape_cast %283 : vector<8xf32> to vector<8x1xf32>
    %285 = arith.mulf %282, %4 : vector<8x256xf32>
    %cst_131 = arith.constant dense<0.000000e+00> : vector<8xf32>
    %286 = vector.multi_reduction <add>, %285, %cst_131 [1] : vector<8x256xf32> to vector<8xf32>
    %287 = vector.shape_cast %286 : vector<8xf32> to vector<8x1xf32>
    %cst_132 = arith.constant 0.000000e+00 : f32
    %288 = vector.broadcast %cst_132 : f32 to vector<8x103xf32>
    %c0_133 = arith.constant 0 : index
    %c0_134 = arith.constant 0 : index
    %289 = vector.load %arg5[%c0_133, %c0_134] : memref<8x128xf32, #tpu.memory_space<vmem>>, vector<8x128xf32>
    %290 = tpu.concatenate %20, %31, %42, %53, %64, %75, %86, %97, %108, %119, %130, %141, %152, %163, %174, %185 in 1 : vector<8x1xf32>, vector<8x1xf32>, vector<8x1xf32>, vector<8x1xf32>, vector<8x1xf32>, vector<8x1xf32>, vector<8x1xf32>, vector<8x1xf32>, vector<8x1xf32>, vector<8x1xf32>, vector<8x1xf32>, vector<8x1xf32>, vector<8x1xf32>, vector<8x1xf32>, vector<8x1xf32>, vector<8x1xf32> -> vector<8x16xf32>
    %291 = tpu.concatenate %196, %207, %218, %229, %240, %251, %262, %273, %284, %288 in 1 : vector<8x1xf32>, vector<8x1xf32>, vector<8x1xf32>, vector<8x1xf32>, vector<8x1xf32>, vector<8x1xf32>, vector<8x1xf32>, vector<8x1xf32>, vector<8x1xf32>, vector<8x103xf32> -> vector<8x112xf32>
    %292 = tpu.concatenate %290, %291 in 1 : vector<8x16xf32>, vector<8x112xf32> -> vector<8x128xf32>
    %293 = arith.addf %289, %292 : vector<8x128xf32>
    %c0_135 = arith.constant 0 : index
    %c0_136 = arith.constant 0 : index
    %294 = vector.load %arg5[%c0_135, %c0_136] : memref<8x128xf32, #tpu.memory_space<vmem>>, vector<8x128xf32>
    tpu.vector_store %arg5[%c0_135, %c0_136], %293 {strides = array<i32>} : memref<8x128xf32, #tpu.memory_space<vmem>>, vector<8x128xf32>,
    %c0_137 = arith.constant 0 : index
    %c0_138 = arith.constant 0 : index
    %295 = vector.load %arg6[%c0_137, %c0_138] : memref<8x128xf32, #tpu.memory_space<vmem>>, vector<8x128xf32>
    %296 = tpu.concatenate %23, %34, %45, %56, %67, %78, %89, %100, %111, %122, %133, %144, %155, %166, %177, %188 in 1 : vector<8x1xf32>, vector<8x1xf32>, vector<8x1xf32>, vector<8x1xf32>, vector<8x1xf32>, vector<8x1xf32>, vector<8x1xf32>, vector<8x1xf32>, vector<8x1xf32>, vector<8x1xf32>, vector<8x1xf32>, vector<8x1xf32>, vector<8x1xf32>, vector<8x1xf32>, vector<8x1xf32>, vector<8x1xf32> -> vector<8x16xf32>
    %297 = tpu.concatenate %199, %210, %221, %232, %243, %254, %265, %276, %287, %288 in 1 : vector<8x1xf32>, vector<8x1xf32>, vector<8x1xf32>, vector<8x1xf32>, vector<8x1xf32>, vector<8x1xf32>, vector<8x1xf32>, vector<8x1xf32>, vector<8x1xf32>, vector<8x103xf32> -> vector<8x112xf32>
    %298 = tpu.concatenate %296, %297 in 1 : vector<8x16xf32>, vector<8x112xf32> -> vector<8x128xf32>
    %299 = arith.addf %295, %298 : vector<8x128xf32>
    %c0_139 = arith.constant 0 : index
    %c0_140 = arith.constant 0 : index
    %300 = vector.load %arg6[%c0_139, %c0_140] : memref<8x128xf32, #tpu.memory_space<vmem>>, vector<8x128xf32>
    tpu.vector_store %arg6[%c0_139, %c0_140], %299 {strides = array<i32>} : memref<8x128xf32, #tpu.memory_space<vmem>>, vector<8x128xf32>,
    %c1_i32 = arith.constant 1 : i32
    %301 = arith.cmpi eq, %arg1, %c1_i32 : i32
    %302 = arith.extui %301 : i1 to i32
    %c0_i32_141 = arith.constant 0 : i32
    %303 = arith.cmpi ne, %302, %c0_i32_141 : i32
    scf.if %303 {
      %c0_142 = arith.constant 0 : index
      %c0_143 = arith.constant 0 : index
      %304 = vector.load %arg5[%c0_142, %c0_143] : memref<8x128xf32, #tpu.memory_space<vmem>>, vector<8x128xf32>
      %c0_144 = arith.constant 0 : index
      %c0_145 = arith.constant 0 : index
      %305 = vector.load %arg6[%c0_144, %c0_145] : memref<8x128xf32, #tpu.memory_space<vmem>>, vector<8x128xf32>
      %cst_146 = arith.constant 1.000000e-16 : f32
      %306 = vector.broadcast %cst_146 : f32 to vector<8x128xf32>
      %307 = arith.addf %306, %304 : vector<8x128xf32>
      %308 = arith.divf %305, %307 : vector<8x128xf32>
      %cst_147 = arith.constant 0.000000e+00 : f32
      %309 = vector.broadcast %cst_147 : f32 to vector<8x1xf32>
      %310 = vector.extract_strided_slice %305 {offsets = [0, 0], sizes = [8, 127], strides = [1, 1]} : vector<8x128xf32> to vector<8x127xf32>
      %311 = tpu.concatenate %309, %310 in 1 : vector<8x1xf32>, vector<8x127xf32> -> vector<8x128xf32>
      %312 = arith.subf %305, %311 : vector<8x128xf32>
      %313 = tpu.iota {dimensions = array<i32: 1>} : vector<8x128xi32>
      %c25_i32 = arith.constant 25 : i32
      %314 = vector.broadcast %c25_i32 : i32 to vector<8x128xi32>
      %315 = arith.cmpi slt, %313, %314 : vector<8x128xi32>
      %cst_148 = arith.constant 0.000000e+00 : f32
      %316 = vector.broadcast %cst_148 : f32 to vector<8x128xf32>
      %317 = arith.select %315, %312, %316 : vector<8x128xi1>, vector<8x128xf32>
      %cst_149 = arith.constant dense<0.000000e+00> : vector<8xf32>
      %318 = vector.multi_reduction <add>, %317, %cst_149 [1] : vector<8x128xf32> to vector<8xf32>
      %319 = vector.shape_cast %318 : vector<8xf32> to vector<8x1xf32>
      %320 = arith.mulf %308, %317 : vector<8x128xf32>
      %cst_150 = arith.constant dense<0.000000e+00> : vector<8xf32>
      %321 = vector.multi_reduction <add>, %320, %cst_150 [1] : vector<8x128xf32> to vector<8xf32>
      %322 = vector.shape_cast %321 : vector<8xf32> to vector<8x1xf32>
      %323 = arith.divf %322, %319 : vector<8x1xf32>
      %324 = vector.shape_cast %323 : vector<8x1xf32> to vector<8x1xf32>
      %325 = vector.broadcast %324 : vector<8x1xf32> to vector<8x128xf32>
      %c0_151 = arith.constant 0 : index
      %c0_152 = arith.constant 0 : index
      %326 = vector.load %arg4[%c0_151, %c0_152] : memref<8x128xf32, #tpu.memory_space<vmem>>, vector<8x128xf32>
      tpu.vector_store %arg4[%c0_151, %c0_152], %325 {strides = array<i32>} : memref<8x128xf32, #tpu.memory_space<vmem>>, vector<8x128xf32>,
    } else {
    }
    return
  }
  func.func @transform_0(%arg0: i32, %arg1: i32) -> (i32, i32) {
    %c0_i32 = arith.constant 0 : i32
    return %arg0, %arg1 : i32, i32
  }
  func.func @transform_1(%arg0: i32, %arg1: i32) -> (i32, i32) {
    %c0_i32 = arith.constant 0 : i32
    return %arg0, %arg1 : i32, i32
  }
  func.func @transform_2(%arg0: i32, %arg1: i32) -> (i32, i32) {
    %c0_i32 = arith.constant 0 : i32
    %c0_i32_0 = arith.constant 0 : i32
    return %arg0, %c0_i32 : i32, i32
  }
}

</mosaic_0001>

<llo_original>
// kernel: tpu_custom_call.1
$region0: #{tpu_custom_call.1}
  #allocation0 [shape = 'u32[]', space=smem, size = 0x4, offset = 0x4, fixed_abs, tag = 'smem constant byte address 0x4 - core index']
  #allocation1 [shape = 'u32[72,128]{1,0:T(1,128)}', space=vmem, size = 0x9000, scoped, tag = 'internal scratch']
  #allocation2 [shape = 'f32[8,128]{1,0:T(8,128)}', space=vmem, size = 0x1000, scoped, tag = 'scratch operand']
  #allocation3 [shape = 'f32[8,128]{1,0:T(8,128)}', space=vmem, size = 0x1000, scoped, tag = 'scratch operand']
  %s0 = inlined_call_operand.hbm [shape: f32[16,512], index: 0, kind: input, shape index: {}]
  %s1 = inlined_call_operand.hbm [shape: f32[16,512], index: 1, kind: input, shape index: {}]
  %s2 = inlined_call_operand.hbm [shape: f32[16,128], index: 2, kind: output, shape index: {}]
  %s3 = sld [smem:[#allocation0]]
  $region57: #{tpu_custom_call.1} parent=0
    _
  %s5 = ssub.s32 1, %s3
  %s6 = scalar_select 0, %s5, %s3
  $region1: #{tpu_custom_call.1} parent=0
    #allocation4 [shape = 'u8[16384]{0}', space=vmem, size = 0x4000, scoped, tag = 'input window, operand 0']
    #allocation5 [shape = 's32[2]{0}', space=sflag, size = 0x8, scoped, tag = 'scoped memory for tpu_custom_call.1']
    #allocation6 [shape = 's32[2]{0}', space=sflag, size = 0x8, scoped, tag = 'scoped memory for tpu_custom_call.1']
    #allocation7 [shape = 'u8[16384]{0}', space=vmem, size = 0x4000, scoped, tag = 'input window, operand 1']
    #allocation8 [shape = 's32[2]{0}', space=sflag, size = 0x8, scoped, tag = 'scoped memory for tpu_custom_call.1']
    #allocation9 [shape = 'u8[8192]{0}', space=vmem, size = 0x2000, scoped, tag = 'output window, operand 0']
    %7 = vsyncpa [#allocation5], 0
    %s8 = scalar_lea.sflag [#allocation5], 1
    %9 = vsyncpa %s8, 0
    %10 = vsyncpa [#allocation8], 0
    %s11 = scalar_lea.sflag [#allocation8], 1
    %12 = vsyncpa %s11, 0
    %13 = vsyncpa [#allocation6], 0
    %s14 = scalar_lea.sflag [#allocation6], 1
    %15 = vsyncpa %s14, 0
    loop: start=0, step=1, limit=6
    $region2: #{tpu_custom_call.1} parent=1 // loop_pre_header
      _
    $region3: #{tpu_custom_call.1} parent=1 // loop_header
      %s17 = sphi 0, %s21
      %p18 = scmp.ge.s32.totalorder %s17, 6
      %s24 = sphi 0, %s36
      %s25 = sphi 0, %s32
      %s26 = sphi 0, %s24
      %s27 = sphi 0, %s25
      %s28 = sphi 0, %s26
      %s29 = sphi 0, %s27
      %s41 = sphi 0, %s43
      %s44 = sphi 0, %s41
      %s45 = sphi 0, %s44
      %s61 = sphi 0, %s45
      %s69 = sphi 0, %s71
      %s72 = sphi 0, %s69
      %s73 = sphi 0, %s72
      %s89 = sphi 0, %s73
      %s95 = sphi 0, %s97
      %s98 = sphi 0, %s95
      %s99 = sphi 0, %s98
      %s115 = sphi 0, %s99
    $region4: #{tpu_custom_call.1} parent=1 // loop_header_branch
      %20 = sbr.rel (%p18) target = $region8
    $region5: #{tpu_custom_call.1} parent=1 // loop_body
      %s22 = ssub.s32 %s17, 1
      %s23 = ssub.s32 %s17, 2
      %s30 = sadd.s32 1, %s25
      %p31 = scmp.ge.s32.totalorder %s30, 2
      %s32 = scalar_select %p31, 0, %s30
      %s33 = sadd.s32 1, %s24
      %s34 = scalar_select %p31, %s33, %s24
      %p35 = scmp.ge.s32.totalorder %s34, 2
      %s36 = scalar_select %p35, 0, %s34
      %s37 = ssub.s32 %s24, %s36
      %s38 = ssub.s32 %s25, %s32
      %s39 = sor.u32 %s37, %s38
      %p40 = scmp.eq.s32.totalorder %s39, 0
      %s42 = sadd.s32 %s41, 1
      %s43 = scalar_select %p40, %s41, %s42
      %p46 = pneg %p40
      %p47 = scmp.eq.s32.totalorder %s17, 3
      %p48 = por %p46, %p47
      %p49 = scmp.ne.s32.totalorder %s41, %s44
      %p50 = scmp.eq.s32.totalorder %s17, 0
      %p51 = por %p49, %p50
      %p52 = scmp.ne.s32.totalorder %s41, %s44
      %p53 = scmp.eq.s32.totalorder %s22, 3
      %p54 = por %p52, %p53
      %p55 = scmp.ne.s32.totalorder %s44, %s45
      %p56 = scmp.eq.s32.totalorder %s22, 0
      %p57 = por %p55, %p56
      %p58 = scmp.ne.s32.totalorder %s44, %s45
      %p59 = scmp.eq.s32.totalorder %s23, 3
      %p60 = por %p58, %p59
      %p62 = scmp.ne.s32.totalorder %s45, %s61
      %p63 = scmp.eq.s32.totalorder %s23, 0
      %p64 = por %p62, %p63
      %s65 = ssub.s32 %s24, %s36
      %s66 = ssub.s32 %s25, %s32
      %s67 = sor.u32 %s65, %s66
      %p68 = scmp.eq.s32.totalorder %s67, 0
      %s70 = sadd.s32 %s69, 1
      %s71 = scalar_select %p68, %s69, %s70
      %p74 = pneg %p68
      %p75 = scmp.eq.s32.totalorder %s17, 3
      %p76 = por %p74, %p75
      %p77 = scmp.ne.s32.totalorder %s69, %s72
      %p78 = scmp.eq.s32.totalorder %s17, 0
      %p79 = por %p77, %p78
      %p80 = scmp.ne.s32.totalorder %s69, %s72
      %p81 = scmp.eq.s32.totalorder %s22, 3
      %p82 = por %p80, %p81
      %p83 = scmp.ne.s32.totalorder %s72, %s73
      %p84 = scmp.eq.s32.totalorder %s22, 0
      %p85 = por %p83, %p84
      %p86 = scmp.ne.s32.totalorder %s72, %s73
      %p87 = scmp.eq.s32.totalorder %s23, 3
      %p88 = por %p86, %p87
      %p90 = scmp.ne.s32.totalorder %s73, %s89
      %p91 = scmp.eq.s32.totalorder %s23, 0
      %p92 = por %p90, %p91
      %s93 = ssub.s32 %s24, %s36
      %p94 = scmp.eq.s32.totalorder %s93, 0
      %s96 = sadd.s32 %s95, 1
      %s97 = scalar_select %p94, %s95, %s96
      %p100 = pneg %p94
      %p101 = scmp.eq.s32.totalorder %s17, 3
      %p102 = por %p100, %p101
      %p103 = scmp.ne.s32.totalorder %s95, %s98
      %p104 = scmp.eq.s32.totalorder %s17, 0
      %p105 = por %p103, %p104
      %p106 = scmp.ne.s32.totalorder %s95, %s98
      %p107 = scmp.eq.s32.totalorder %s22, 3
      %p108 = por %p106, %p107
      %p109 = scmp.ne.s32.totalorder %s98, %s99
      %p110 = scmp.eq.s32.totalorder %s22, 0
      %p111 = por %p109, %p110
      %p112 = scmp.ne.s32.totalorder %s98, %s99
      %p113 = scmp.eq.s32.totalorder %s23, 3
      %p114 = por %p112, %p113
      %p116 = scmp.ne.s32.totalorder %s99, %s115
      %p117 = scmp.eq.s32.totalorder %s23, 0
      %p118 = por %p116, %p117
      %p119 = scmp.le.s32.totalorder 1, %s17
      %p120 = scmp.lt.s32.totalorder %s17, 5
      %p121 = pnand %p119, %p120
      %p122 = pneg %p121
      // Predicated region
      $region9: #{tpu_custom_call.1} parent=5 // pred_check
        _
      $region10: #{tpu_custom_call.1} parent=5 // pred_check_branch
        %124 = sbr.rel (%p121) target = $region12
      $region11: #{tpu_custom_call.1} parent=5 // pred_region
        %s125 = ssub.s32 %s17, 1
      $region12: #{tpu_custom_call.1} parent=5 // pred_fallthru
        _
      %p126 = scmp.lt.s32.totalorder %s17, 4
      // Predicated region
      $region13: #{tpu_custom_call.1} parent=5 // pred_check
        %p127 = pneg %p126
      $region14: #{tpu_custom_call.1} parent=5 // pred_check_branch
        %129 = sbr.rel (%p127) target = $region16
      $region15: #{tpu_custom_call.1} parent=5 // pred_region
        // Predicated region
        $region17: #{tpu_custom_call.1} parent=15 // pred_check
          %p130 = pneg %p51
        $region18: #{tpu_custom_call.1} parent=15 // pred_check_branch
          %132 = sbr.rel (%p130) target = $region20
        $region19: #{tpu_custom_call.1} parent=15 // pred_region
          %s133 = sand.u32 %s41, 1
          %s134 = scalar_lea.sflag [#allocation5], %s133
          %s135 = sand.u32 %s41, 1
          %s136 = smul.addr %s135, 16
          %s137 = scalar_lea.vmem [#allocation4], %s136
          %s138 = smul.u32 2, %s25
          %140 = vsyncadd %s134, 0
          %s141 = smul.addr %s24, 4
          %s142 = sadd.s32 %s138, %s141
          %s143 = smul.addr %s142, 8
          %s144 = scalar_lea.hbm %s0, %s143
          %s146 = sshll.u32 %s144, 4
          %s147 = int_to_ptr.hbm [resolvable:$true] %s146
          %s148 = sshll.u32 %s137, 4
          %s149 = int_to_ptr.vmem [resolvable:$true] %s148
          %151 = dma.hbm_to_vmem [thread:$0]  %s147, 256, %s149, %s134
        $region20: #{tpu_custom_call.1} parent=15 // pred_fallthru
          _
        // Predicated region
        $region21: #{tpu_custom_call.1} parent=15 // pred_check
          %p152 = pneg %p79
        $region22: #{tpu_custom_call.1} parent=15 // pred_check_branch
          %154 = sbr.rel (%p152) target = $region24
        $region23: #{tpu_custom_call.1} parent=15 // pred_region
          %s155 = sand.u32 %s69, 1
          %s156 = scalar_lea.sflag [#allocation8], %s155
          %s157 = sand.u32 %s69, 1
          %s158 = smul.addr %s157, 16
          %s159 = scalar_lea.vmem [#allocation7], %s158
          %s160 = smul.u32 2, %s25
          %162 = vsyncadd %s156, 0
          %s163 = smul.addr %s24, 4
          %s164 = sadd.s32 %s160, %s163
          %s165 = smul.addr %s164, 8
          %s166 = scalar_lea.hbm %s1, %s165
          %s168 = sshll.u32 %s166, 4
          %s169 = int_to_ptr.hbm [resolvable:$true] %s168
          %s170 = sshll.u32 %s159, 4
          %s171 = int_to_ptr.vmem [resolvable:$true] %s170
          %173 = dma.hbm_to_vmem [thread:$0]  %s169, 256, %s171, %s156
        $region24: #{tpu_custom_call.1} parent=15 // pred_fallthru
          _
      $region16: #{tpu_custom_call.1} parent=5 // pred_fallthru
        _
      %p174 = scmp.le.s32.totalorder 1, %s17
      %p175 = scmp.lt.s32.totalorder %s17, 5
      %p176 = pnand %p174, %p175
      %p177 = pneg %p176
      // Predicated region
      $region25: #{tpu_custom_call.1} parent=5 // pred_check
        _
      $region26: #{tpu_custom_call.1} parent=5 // pred_check_branch
        %179 = sbr.rel (%p176) target = $region28
      $region27: #{tpu_custom_call.1} parent=5 // pred_region
        %s180 = ssub.s32 %s17, 1
        %s181 = sand.u32 %s44, 1
        %s182 = scalar_lea.sflag [#allocation5], %s181
        %s183 = sand.u32 %s44, 1
        %s184 = smul.addr %s183, 16
        %s185 = scalar_lea.vmem [#allocation4], %s184
        // Predicated region
        $region29: #{tpu_custom_call.1} parent=27 // pred_check
          %p186 = pneg %p57
        $region30: #{tpu_custom_call.1} parent=27 // pred_check_branch
          %188 = sbr.rel (%p186) target = $region32
        $region31: #{tpu_custom_call.1} parent=27 // pred_region
          %190 = dma.done %s182, 256
        $region32: #{tpu_custom_call.1} parent=27 // pred_fallthru
          _
        %s191 = sand.u32 %s72, 1
        %s192 = scalar_lea.sflag [#allocation8], %s191
        %s193 = sand.u32 %s72, 1
        %s194 = smul.addr %s193, 16
        %s195 = scalar_lea.vmem [#allocation7], %s194
        // Predicated region
        $region33: #{tpu_custom_call.1} parent=27 // pred_check
          %p196 = pneg %p85
        $region34: #{tpu_custom_call.1} parent=27 // pred_check_branch
          %198 = sbr.rel (%p196) target = $region36
        $region35: #{tpu_custom_call.1} parent=27 // pred_region
          %200 = dma.done %s192, 256
        $region36: #{tpu_custom_call.1} parent=27 // pred_fallthru
          _
        %s201 = sand.u32 %s44, 1
        %s202 = scalar_lea.sflag [#allocation5], %s201
        %s203 = sand.u32 %s44, 1
        %s204 = smul.addr %s203, 16
        %s205 = scalar_lea.vmem [#allocation4], %s204
        %p206 = pneg %p57
        %p207 = pneg %p54
        %s208 = sand.u32 %s72, 1
        %s209 = scalar_lea.sflag [#allocation8], %s208
        %s210 = sand.u32 %s72, 1
        %s211 = smul.addr %s210, 16
        %s212 = scalar_lea.vmem [#allocation7], %s211
        %p213 = pneg %p85
        %p214 = pneg %p82
        %p215 = pneg %p111
        %p216 = pneg %p108
        %s217 = sand.u32 %s98, 1
        %s218 = scalar_lea.sflag [#allocation6], %s217
        %s219 = sand.u32 %s98, 1
        %s220 = smul.addr %s219, 8
        %s221 = scalar_lea.vmem [#allocation9], %s220
        %s222 = smul.u32 2, %s27
        %s223 = smul.u32 2, %s27
        %p224 = scmp.eq.s32.totalorder %s27, 0
        // Predicated region
        $region37: #{tpu_custom_call.1} parent=27 // pred_check
          %p225 = pneg %p224
        $region38: #{tpu_custom_call.1} parent=27 // pred_check_branch
          %227 = sbr.rel (%p225) target = $region40
        $region39: #{tpu_custom_call.1} parent=27 // pred_region
          %228 = vst [vmem:[#allocation2] sm:$0xff] 0.0
          %229 = vst [vmem:[#allocation3] sm:$0xff] 0.0
        $region40: #{tpu_custom_call.1} parent=27 // pred_fallthru
          _
        %v230 = vld [vmem:[%s185] sm:$0xff]
        %v231 = vld [vmem:[%s185 + $0x8] sm:$0xff]
        %v232 = vld [vmem:[%s195] sm:$0xff]
        %v233 = vld [vmem:[%s195 + $0x8] sm:$0xff]
        %v234 = vsub.f32 1.0, %v230
        %v235 = vsub.f32 1.0, %v231
        %v236 = vmul.f32 %v234, 24.0
        %v237 = vmul.f32 %v235, 24.0
        %v238 = vmax.f32 %v236, 0.0
        %v239 = vmax.f32 %v237, 0.0
        %v240 = vmin.f32 %v238, 24.0
        %v241 = vmin.f32 %v239, 24.0
        %v242 = vsub.f32 1.0, %v240
        %v243 = vsub.f32 1.0, %v241
        %v244 = vmin.f32 %v242, 1.0
        %v245 = vmin.f32 %v243, 1.0
        %v246 = vmax.f32 %v244, 0.0
        %v247 = vmax.f32 %v245, 0.0
        %v248 = vadd.f32 %v246, %v247
        %249 = vadd.xlane.f32.xlu0 %v248
        %v250 = vpop.xlane.xlu0 %249
        %v251 = vmul.f32 %v246, %v232
        %v252 = vmul.f32 %v247, %v233
        %v253 = vadd.f32 %v251, %v252
        %254 = vadd.xlane.f32.xlu0 %v253
        %v255 = vpop.xlane.xlu0 %254
        %v256 = vsub.f32 2.0, %v240
        %v257 = vsub.f32 2.0, %v241
        %v258 = vmin.f32 %v256, 1.0
        %v259 = vmin.f32 %v257, 1.0
        %v260 = vmax.f32 %v258, 0.0
        %v261 = vmax.f32 %v259, 0.0
        %v262 = vadd.f32 %v260, %v261
        %263 = vadd.xlane.f32.xlu0 %v262
        %v264 = vpop.xlane.xlu0 %263
        %v265 = vmul.f32 %v260, %v232
        %v266 = vmul.f32 %v261, %v233
        %v267 = vadd.f32 %v265, %v266
        %268 = vadd.xlane.f32.xlu0 %v267
        %v269 = vpop.xlane.xlu0 %268
        %v270 = vsub.f32 3.0, %v240
        %v271 = vsub.f32 3.0, %v241
        %v272 = vmin.f32 %v270, 1.0
        %v273 = vmin.f32 %v271, 1.0
        %v274 = vmax.f32 %v272, 0.0
        %v275 = vmax.f32 %v273, 0.0
        %v276 = vadd.f32 %v274, %v275
        %277 = vadd.xlane.f32.xlu0 %v276
        %v278 = vpop.xlane.xlu0 %277
        %v279 = vmul.f32 %v274, %v232
        %v280 = vmul.f32 %v275, %v233
        %v281 = vadd.f32 %v279, %v280
        %282 = vadd.xlane.f32.xlu0 %v281
        %v283 = vpop.xlane.xlu0 %282
        %v284 = vsub.f32 4.0, %v240
        %v285 = vsub.f32 4.0, %v241
        %v286 = vmin.f32 %v284, 1.0
        %v287 = vmin.f32 %v285, 1.0
        %v288 = vmax.f32 %v286, 0.0
        %v289 = vmax.f32 %v287, 0.0
        %v290 = vadd.f32 %v288, %v289
        %291 = vadd.xlane.f32.xlu0 %v290
        %v292 = vpop.xlane.xlu0 %291
        %v293 = vmul.f32 %v288, %v232
        %v294 = vmul.f32 %v289, %v233
        %v295 = vadd.f32 %v293, %v294
        %296 = vadd.xlane.f32.xlu0 %v295
        %v297 = vpop.xlane.xlu0 %296
        %v298 = vsub.f32 5.0, %v240
        %v299 = vsub.f32 5.0, %v241
        %v300 = vmin.f32 %v298, 1.0
        %v301 = vmin.f32 %v299, 1.0
        %v302 = vmax.f32 %v300, 0.0
        %v303 = vmax.f32 %v301, 0.0
        %v304 = vadd.f32 %v302, %v303
        %305 = vadd.xlane.f32.xlu0 %v304
        %v306 = vpop.xlane.xlu0 %305
        %v307 = vmul.f32 %v302, %v232
        %v308 = vmul.f32 %v303, %v233
        %v309 = vadd.f32 %v307, %v308
        %310 = vadd.xlane.f32.xlu0 %v309
        %v311 = vpop.xlane.xlu0 %310
        %v312 = vsub.f32 6.0, %v240
        %v313 = vsub.f32 6.0, %v241
        %v314 = vmin.f32 %v312, 1.0
        %v315 = vmin.f32 %v313, 1.0
        %v316 = vmax.f32 %v314, 0.0
        %v317 = vmax.f32 %v315, 0.0
        %v318 = vadd.f32 %v316, %v317
        %319 = vadd.xlane.f32.xlu0 %v318
        %v320 = vpop.xlane.xlu0 %319
        %v321 = vmul.f32 %v316, %v232
        %v322 = vmul.f32 %v317, %v233
        %v323 = vadd.f32 %v321, %v322
        %324 = vadd.xlane.f32.xlu0 %v323
        %v325 = vpop.xlane.xlu0 %324
        %v326 = vsub.f32 7.0, %v240
        %v327 = vsub.f32 7.0, %v241
        %v328 = vmin.f32 %v326, 1.0
        %v329 = vmin.f32 %v327, 1.0
        %v330 = vmax.f32 %v328, 0.0
        %v331 = vmax.f32 %v329, 0.0
        %v332 = vadd.f32 %v330, %v331
        %333 = vadd.xlane.f32.xlu0 %v332
        %v334 = vpop.xlane.xlu0 %333
        %v335 = vmul.f32 %v330, %v232
        %v336 = vmul.f32 %v331, %v233
        %v337 = vadd.f32 %v335, %v336
        %338 = vadd.xlane.f32.xlu0 %v337
        %v339 = vpop.xlane.xlu0 %338
        %v340 = vsub.f32 8.0, %v240
        %v341 = vsub.f32 8.0, %v241
        %v342 = vmin.f32 %v340, 1.0
        %v343 = vmin.f32 %v341, 1.0
        %v344 = vmax.f32 %v342, 0.0
        %v345 = vmax.f32 %v343, 0.0
        %v346 = vadd.f32 %v344, %v345
        %347 = vadd.xlane.f32.xlu0 %v346
        %v348 = vpop.xlane.xlu0 %347
        %v349 = vmul.f32 %v344, %v232
        %v350 = vmul.f32 %v345, %v233
        %v351 = vadd.f32 %v349, %v350
        %352 = vadd.xlane.f32.xlu0 %v351
        %v353 = vpop.xlane.xlu0 %352
        %v354 = vsub.f32 9.0, %v240
        %v355 = vsub.f32 9.0, %v241
        %v356 = vmin.f32 %v354, 1.0
        %v357 = vmin.f32 %v355, 1.0
        %v358 = vmax.f32 %v356, 0.0
        %v359 = vmax.f32 %v357, 0.0
        %v360 = vadd.f32 %v358, %v359
        %361 = vadd.xlane.f32.xlu0 %v360
        %v362 = vpop.xlane.xlu0 %361
        %v363 = vmul.f32 %v358, %v232
        %v364 = vmul.f32 %v359, %v233
        %v365 = vadd.f32 %v363, %v364
        %366 = vadd.xlane.f32.xlu0 %v365
        %v367 = vpop.xlane.xlu0 %366
        %v368 = vsub.f32 10.0, %v240
        %v369 = vsub.f32 10.0, %v241
        %v370 = vmin.f32 %v368, 1.0
        %v371 = vmin.f32 %v369, 1.0
        %v372 = vmax.f32 %v370, 0.0
        %v373 = vmax.f32 %v371, 0.0
        %v374 = vadd.f32 %v372, %v373
        %375 = vadd.xlane.f32.xlu0 %v374
        %v376 = vpop.xlane.xlu0 %375
        %v377 = vmul.f32 %v372, %v232
        %v378 = vmul.f32 %v373, %v233
        %v379 = vadd.f32 %v377, %v378
        %380 = vadd.xlane.f32.xlu0 %v379
        %v381 = vpop.xlane.xlu0 %380
        %v382 = vsub.f32 11.0, %v240
        %v383 = vsub.f32 11.0, %v241
        %v384 = vmin.f32 %v382, 1.0
        %v385 = vmin.f32 %v383, 1.0
        %v386 = vmax.f32 %v384, 0.0
        %v387 = vmax.f32 %v385, 0.0
        %v388 = vadd.f32 %v386, %v387
        %389 = vadd.xlane.f32.xlu0 %v388
        %v390 = vpop.xlane.xlu0 %389
        %v391 = vmul.f32 %v386, %v232
        %v392 = vmul.f32 %v387, %v233
        %v393 = vadd.f32 %v391, %v392
        %394 = vadd.xlane.f32.xlu0 %v393
        %v395 = vpop.xlane.xlu0 %394
        %v396 = vsub.f32 12.0, %v240
        %v397 = vsub.f32 12.0, %v241
        %v398 = vmin.f32 %v396, 1.0
        %v399 = vmin.f32 %v397, 1.0
        %v400 = vmax.f32 %v398, 0.0
        %v401 = vmax.f32 %v399, 0.0
        %v402 = vadd.f32 %v400, %v401
        %403 = vadd.xlane.f32.xlu0 %v402
        %v404 = vpop.xlane.xlu0 %403
        %v405 = vmul.f32 %v400, %v232
        %v406 = vmul.f32 %v401, %v233
        %v407 = vadd.f32 %v405, %v406
        %408 = vadd.xlane.f32.xlu0 %v407
        %v409 = vpop.xlane.xlu0 %408
        %v410 = vsub.f32 13.0, %v240
        %v411 = vsub.f32 13.0, %v241
        %v412 = vmin.f32 %v410, 1.0
        %v413 = vmin.f32 %v411, 1.0
        %v414 = vmax.f32 %v412, 0.0
        %v415 = vmax.f32 %v413, 0.0
        %v416 = vadd.f32 %v414, %v415
        %417 = vadd.xlane.f32.xlu0 %v416
        %v418 = vpop.xlane.xlu0 %417
        %v419 = vmul.f32 %v414, %v232
        %v420 = vmul.f32 %v415, %v233
        %v421 = vadd.f32 %v419, %v420
        %422 = vadd.xlane.f32.xlu0 %v421
        %v423 = vpop.xlane.xlu0 %422
        %v424 = vsub.f32 14.0, %v240
        %v425 = vsub.f32 14.0, %v241
        %v426 = vmin.f32 %v424, 1.0
        %v427 = vmin.f32 %v425, 1.0
        %v428 = vmax.f32 %v426, 0.0
        %v429 = vmax.f32 %v427, 0.0
        %v430 = vadd.f32 %v428, %v429
        %431 = vadd.xlane.f32.xlu0 %v430
        %v432 = vpop.xlane.xlu0 %431
        %v433 = vmul.f32 %v428, %v232
        %v434 = vmul.f32 %v429, %v233
        %v435 = vadd.f32 %v433, %v434
        %436 = vadd.xlane.f32.xlu0 %v435
        %v437 = vpop.xlane.xlu0 %436
        %v438 = vsub.f32 15.0, %v240
        %v439 = vsub.f32 15.0, %v241
        %v440 = vmin.f32 %v438, 1.0
        %v441 = vmin.f32 %v439, 1.0
        %v442 = vmax.f32 %v440, 0.0
        %v443 = vmax.f32 %v441, 0.0
        %v444 = vadd.f32 %v442, %v443
        %445 = vadd.xlane.f32.xlu0 %v444
        %v446 = vpop.xlane.xlu0 %445
        %v447 = vmul.f32 %v442, %v232
        %v448 = vmul.f32 %v443, %v233
        %v449 = vadd.f32 %v447, %v448
        %450 = vadd.xlane.f32.xlu0 %v449
        %v451 = vpop.xlane.xlu0 %450
        %v452 = vsub.f32 16.0, %v240
        %v453 = vsub.f32 16.0, %v241
        %v454 = vmin.f32 %v452, 1.0
        %v455 = vmin.f32 %v453, 1.0
        %v456 = vmax.f32 %v454, 0.0
        %v457 = vmax.f32 %v455, 0.0
        %v458 = vadd.f32 %v456, %v457
        %459 = vadd.xlane.f32.xlu0 %v458
        %v460 = vpop.xlane.xlu0 %459
        %v461 = vmul.f32 %v456, %v232
        %v462 = vmul.f32 %v457, %v233
        %v463 = vadd.f32 %v461, %v462
        %464 = vadd.xlane.f32.xlu0 %v463
        %v465 = vpop.xlane.xlu0 %464
        %v466 = vsub.f32 17.0, %v240
        %v467 = vsub.f32 17.0, %v241
        %v468 = vmin.f32 %v466, 1.0
        %v469 = vmin.f32 %v467, 1.0
        %v470 = vmax.f32 %v468, 0.0
        %v471 = vmax.f32 %v469, 0.0
        %v472 = vadd.f32 %v470, %v471
        %473 = vadd.xlane.f32.xlu0 %v472
        %v474 = vpop.xlane.xlu0 %473
        %v475 = vmul.f32 %v470, %v232
        %v476 = vmul.f32 %v471, %v233
        %v477 = vadd.f32 %v475, %v476
        %478 = vadd.xlane.f32.xlu0 %v477
        %v479 = vpop.xlane.xlu0 %478
        %v480 = vsub.f32 18.0, %v240
        %v481 = vsub.f32 18.0, %v241
        %v482 = vmin.f32 %v480, 1.0
        %v483 = vmin.f32 %v481, 1.0
        %v484 = vmax.f32 %v482, 0.0
        %v485 = vmax.f32 %v483, 0.0
        %v486 = vadd.f32 %v484, %v485
        %487 = vadd.xlane.f32.xlu0 %v486
        %v488 = vpop.xlane.xlu0 %487
        %v489 = vmul.f32 %v484, %v232
        %v490 = vmul.f32 %v485, %v233
        %v491 = vadd.f32 %v489, %v490
        %492 = vadd.xlane.f32.xlu0 %v491
        %v493 = vpop.xlane.xlu0 %492
        %v494 = vsub.f32 19.0, %v240
        %v495 = vsub.f32 19.0, %v241
        %v496 = vmin.f32 %v494, 1.0
        %v497 = vmin.f32 %v495, 1.0
        %v498 = vmax.f32 %v496, 0.0
        %v499 = vmax.f32 %v497, 0.0
        %v500 = vadd.f32 %v498, %v499
        %501 = vadd.xlane.f32.xlu0 %v500
        %v502 = vpop.xlane.xlu0 %501
        %v503 = vmul.f32 %v498, %v232
        %v504 = vmul.f32 %v499, %v233
        %v505 = vadd.f32 %v503, %v504
        %506 = vadd.xlane.f32.xlu0 %v505
        %v507 = vpop.xlane.xlu0 %506
        %v508 = vsub.f32 20.0, %v240
        %v509 = vsub.f32 20.0, %v241
        %v510 = vmin.f32 %v508, 1.0
        %v511 = vmin.f32 %v509, 1.0
        %v512 = vmax.f32 %v510, 0.0
        %v513 = vmax.f32 %v511, 0.0
        %v514 = vadd.f32 %v512, %v513
        %515 = vadd.xlane.f32.xlu0 %v514
        %v516 = vpop.xlane.xlu0 %515
        %v517 = vmul.f32 %v512, %v232
        %v518 = vmul.f32 %v513, %v233
        %v519 = vadd.f32 %v517, %v518
        %520 = vadd.xlane.f32.xlu0 %v519
        %v521 = vpop.xlane.xlu0 %520
        %v522 = vsub.f32 21.0, %v240
        %v523 = vsub.f32 21.0, %v241
        %v524 = vmin.f32 %v522, 1.0
        %v525 = vmin.f32 %v523, 1.0
        %v526 = vmax.f32 %v524, 0.0
        %v527 = vmax.f32 %v525, 0.0
        %v528 = vadd.f32 %v526, %v527
        %529 = vadd.xlane.f32.xlu0 %v528
        %v530 = vpop.xlane.xlu0 %529
        %v531 = vmul.f32 %v526, %v232
        %v532 = vmul.f32 %v527, %v233
        %v533 = vadd.f32 %v531, %v532
        %534 = vadd.xlane.f32.xlu0 %v533
        %v535 = vpop.xlane.xlu0 %534
        %v536 = vsub.f32 22.0, %v240
        %v537 = vsub.f32 22.0, %v241
        %v538 = vmin.f32 %v536, 1.0
        %v539 = vmin.f32 %v537, 1.0
        %v540 = vmax.f32 %v538, 0.0
        %v541 = vmax.f32 %v539, 0.0
        %v542 = vadd.f32 %v540, %v541
        %543 = vadd.xlane.f32.xlu0 %v542
        %v544 = vpop.xlane.xlu0 %543
        %v545 = vmul.f32 %v540, %v232
        %v546 = vmul.f32 %v541, %v233
        %v547 = vadd.f32 %v545, %v546
        %548 = vadd.xlane.f32.xlu0 %v547
        %v549 = vpop.xlane.xlu0 %548
        %v550 = vsub.f32 23.0, %v240
        %v551 = vsub.f32 23.0, %v241
        %v552 = vmin.f32 %v550, 1.0
        %v553 = vmin.f32 %v551, 1.0
        %v554 = vmax.f32 %v552, 0.0
        %v555 = vmax.f32 %v553, 0.0
        %v556 = vadd.f32 %v554, %v555
        %557 = vadd.xlane.f32.xlu0 %v556
        %v558 = vpop.xlane.xlu0 %557
        %v559 = vmul.f32 %v554, %v232
        %v560 = vmul.f32 %v555, %v233
        %v561 = vadd.f32 %v559, %v560
        %562 = vadd.xlane.f32.xlu0 %v561
        %v563 = vpop.xlane.xlu0 %562
        %v564 = vsub.f32 24.0, %v240
        %v565 = vsub.f32 24.0, %v241
        %v566 = vmin.f32 %v564, 1.0
        %v567 = vmin.f32 %v565, 1.0
        %v568 = vmax.f32 %v566, 0.0
        %v569 = vmax.f32 %v567, 0.0
        %v570 = vadd.f32 %v568, %v569
        %571 = vadd.xlane.f32.xlu0 %v570
        %v572 = vpop.xlane.xlu0 %571
        %v573 = vmul.f32 %v568, %v232
        %v574 = vmul.f32 %v569, %v233
        %v575 = vadd.f32 %v573, %v574
        %576 = vadd.xlane.f32.xlu0 %v575
        %v577 = vpop.xlane.xlu0 %576
        %v578 = vsub.f32 25.0, %v240
        %v579 = vsub.f32 25.0, %v241
        %v580 = vmin.f32 %v578, 1.0
        %v581 = vmin.f32 %v579, 1.0
        %v582 = vmax.f32 %v580, 0.0
        %v583 = vmax.f32 %v581, 0.0
        %v584 = vadd.f32 %v582, %v583
        %585 = vadd.xlane.f32.xlu0 %v584
        %v586 = vpop.xlane.xlu0 %585
        %v587 = vmul.f32 %v582, %v232
        %v588 = vmul.f32 %v583, %v233
        %v589 = vadd.f32 %v587, %v588
        %590 = vadd.xlane.f32.xlu0 %v589
        %v591 = vpop.xlane.xlu0 %590
        %v592 = vld [vmem:[#allocation2] sm:$0xff]
        %vm593 = vcmask 7168
        %v594 = vsel %vm593, %v250, %v264
        %vm595 = vcmask 15360
        %v596 = vsel %vm595, %v594, %v278
        %vm597 = vcmask 23552
        %v598 = vsel %vm597, %v596, %v292
        %vm599 = vcmask 31744
        %v600 = vsel %vm599, %v598, %v306
        %vm601 = vcmask 39936
        %v602 = vsel %vm601, %v600, %v320
        %vm603 = vcmask 48128
        %v604 = vsel %vm603, %v602, %v334
        %vm605 = vcmask 56320
        %v606 = vsel %vm605, %v604, %v348
        %vm607 = vcmask 64512
        %v608 = vsel %vm607, %v606, %v362
        %vm609 = vcmask 72704
        %v610 = vsel %vm609, %v608, %v376
        %vm611 = vcmask 80896
        %v612 = vsel %vm611, %v610, %v390
        %vm613 = vcmask 89088
        %v614 = vsel %vm613, %v612, %v404
        %vm615 = vcmask 97280
        %v616 = vsel %vm615, %v614, %v418
        %vm617 = vcmask 105472
        %v618 = vsel %vm617, %v616, %v432
        %vm619 = vcmask 113664
        %v620 = vsel %vm619, %v618, %v446
        %vm621 = vcmask 121856
        %v622 = vsel %vm621, %v620, %v460
        %v623 = vsel %vm593, %v474, %v488
        %v624 = vsel %vm595, %v623, %v502
        %v625 = vsel %vm597, %v624, %v516
        %v626 = vsel %vm599, %v625, %v530
        %v627 = vsel %vm601, %v626, %v544
        %v628 = vsel %vm603, %v627, %v558
        %v629 = vsel %vm605, %v628, %v572
        %v630 = vsel %vm607, %v629, %v586
        %v631 = vsel %vm609, %v630, 0.0
        %633 = vrot.lane.b32.xlu0 %v631, 16
        %v634 = vpop.permute.xlu0 %633
        %vm636 = vcmask 130048
        %v637 = vsel %vm636, %v622, %v634
        %v638 = vadd.f32 %v592, %v637
        %639 = vst [vmem:[#allocation2] sm:$0xff] %v638
        %v640 = vld [vmem:[#allocation3] sm:$0xff]
        %v641 = vsel %vm593, %v255, %v269
        %v642 = vsel %vm595, %v641, %v283
        %v643 = vsel %vm597, %v642, %v297
        %v644 = vsel %vm599, %v643, %v311
        %v645 = vsel %vm601, %v644, %v325
        %v646 = vsel %vm603, %v645, %v339
        %v647 = vsel %vm605, %v646, %v353
        %v648 = vsel %vm607, %v647, %v367
        %v649 = vsel %vm609, %v648, %v381
        %v650 = vsel %vm611, %v649, %v395
        %v651 = vsel %vm613, %v650, %v409
        %v652 = vsel %vm615, %v651, %v423
        %v653 = vsel %vm617, %v652, %v437
        %v654 = vsel %vm619, %v653, %v451
        %v655 = vsel %vm621, %v654, %v465
        %v656 = vsel %vm593, %v479, %v493
        %v657 = vsel %vm595, %v656, %v507
        %v658 = vsel %vm597, %v657, %v521
        %v659 = vsel %vm599, %v658, %v535
        %v660 = vsel %vm601, %v659, %v549
        %v661 = vsel %vm603, %v660, %v563
        %v662 = vsel %vm605, %v661, %v577
        %v663 = vsel %vm607, %v662, %v591
        %v664 = vsel %vm609, %v663, 0.0
        %666 = vrot.lane.b32.xlu0 %v664, 16
        %v667 = vpop.permute.xlu0 %666
        %v669 = vsel %vm636, %v655, %v667
        %v670 = vadd.f32 %v640, %v669
        %671 = vst [vmem:[#allocation3] sm:$0xff] %v670
        %p672 = scmp.eq.s32.totalorder %s27, 1
        // Predicated region
        $region41: #{tpu_custom_call.1} parent=27 // pred_check
          %p673 = pneg %p672
        $region42: #{tpu_custom_call.1} parent=27 // pred_check_branch
          %675 = sbr.rel (%p673) target = $region44
        $region43: #{tpu_custom_call.1} parent=27 // pred_region
          %v676 = vld [vmem:[#allocation2] sm:$0xff]
          %v677 = vld [vmem:[#allocation3] sm:$0xff]
          %v678 = vadd.f32 %v676, 1e-16
          %v679 = vrcp.pop %v678
          %v680 = vmul.f32 %v678, %v679
          %v681 = vsub.f32 1.0, %v680
          %v682 = vmul.f32 %v679, %v681
          %v683 = vadd.f32 %v679, %v682
          %vm684 = vweird.f32 %v678
          %vm685 = vweird.f32 %v679
          %vm686 = vmor %vm684, %vm685
          %v687 = vsel %vm686, %v679, %v683
          %v688 = vand.u32 2147483647, %v678
          %vm689 = vcmp.eq.f32.partialorder %v688, 8.507059e+37
          %v690 = vand.u32 %v678, 2147483648
          %v691 = vor.u32 1.1754944e-38, %v690
          %v692 = vsel %vm689, %v691, %v687
          %v693 = vmul.f32 %v677, %v692
          %695 = vrot.lane.b32.xlu0 %v677, 1
          %v696 = vpop.permute.xlu0 %695
          %v698 = vsel %vm593, 0.0, %v696
          %v699 = vsub.f32 %v677, %v698
          %v700 = vlaneseq
          %v701 = vand.u32 %v700, 127
          %vm702 = vcmp.lt.s32.totalorder %v701, 25
          %v703 = vsel %vm702, %v699, 0.0
          %704 = vadd.xlane.f32.xlu0 %v703
          %v705 = vpop.xlane.xlu0 %704
          %v706 = vmul.f32 %v693, %v703
          %707 = vadd.xlane.f32.xlu0 %v706
          %v708 = vpop.xlane.xlu0 %707
          %v709 = vrcp.pop %v705
          %v710 = vmul.f32 %v705, %v709
          %v711 = vsub.f32 1.0, %v710
          %v712 = vmul.f32 %v709, %v711
          %v713 = vadd.f32 %v709, %v712
          %vm714 = vweird.f32 %v705
          %vm715 = vweird.f32 %v709
          %vm716 = vmor %vm714, %vm715
          %v717 = vsel %vm716, %v709, %v713
          %v718 = vand.u32 2147483647, %v705
          %vm719 = vcmp.eq.f32.partialorder %v718, 8.507059e+37
          %v720 = vand.u32 %v705, 2147483648
          %v721 = vor.u32 1.1754944e-38, %v720
          %v722 = vsel %vm719, %v721, %v717
          %v723 = vmul.f32 %v708, %v722
          %724 = vst [vmem:[%s221] sm:$0xff] %v723
        $region44: #{tpu_custom_call.1} parent=27 // pred_fallthru
          _
        %s725 = sand.u32 %s98, 1
        %s726 = scalar_lea.sflag [#allocation6], %s725
        %s727 = sand.u32 %s98, 1
        %s728 = smul.addr %s727, 8
        %s729 = scalar_lea.vmem [#allocation9], %s728
        // Predicated region
        $region45: #{tpu_custom_call.1} parent=27 // pred_check
          %p730 = pneg %p108
        $region46: #{tpu_custom_call.1} parent=27 // pred_check_branch
          %732 = sbr.rel (%p730) target = $region48
        $region47: #{tpu_custom_call.1} parent=27 // pred_region
          %734 = vsyncadd %s726, 0
          %s735 = smul.addr %s26, 8
          %s736 = scalar_lea.hbm %s2, %s735
          %s738 = sshll.u32 %s729, 4
          %s739 = int_to_ptr.vmem [resolvable:$true] %s738
          %s740 = sshll.u32 %s736, 4
          %s741 = int_to_ptr.hbm [resolvable:$true] %s740
          %743 = dma.vmem_to_hbm [thread:$0]  %s739, 128, %s741, %s726
        $region48: #{tpu_custom_call.1} parent=27 // pred_fallthru
          _
      $region28: #{tpu_custom_call.1} parent=5 // pred_fallthru
        _
      %p744 = scmp.le.s32.totalorder 2, %s17
      // Predicated region
      $region49: #{tpu_custom_call.1} parent=5 // pred_check
        %p745 = pneg %p744
      $region50: #{tpu_custom_call.1} parent=5 // pred_check_branch
        %747 = sbr.rel (%p745) target = $region52
      $region51: #{tpu_custom_call.1} parent=5 // pred_region
        %s748 = ssub.s32 %s17, 2
        // Predicated region
        $region53: #{tpu_custom_call.1} parent=51 // pred_check
          %p749 = pneg %p114
        $region54: #{tpu_custom_call.1} parent=51 // pred_check_branch
          %751 = sbr.rel (%p749) target = $region56
        $region55: #{tpu_custom_call.1} parent=51 // pred_region
          %s752 = sand.u32 %s99, 1
          %s753 = scalar_lea.sflag [#allocation6], %s752
          %s754 = sand.u32 %s99, 1
          %s755 = smul.addr %s754, 8
          %s756 = scalar_lea.vmem [#allocation9], %s755
          %758 = dma.done %s753, 128
        $region56: #{tpu_custom_call.1} parent=51 // pred_fallthru
          _
      $region52: #{tpu_custom_call.1} parent=5 // pred_fallthru
        _
    $region6: #{tpu_custom_call.1} parent=1 // loop_footer
      %s21 = sadd.s32 1, %s17
    $region7: #{tpu_custom_call.1} parent=1 // loop_footer_branch
      %16 = sbr.rel target = $region3
    $region8: #{tpu_custom_call.1} parent=1 // loop_exit
      _
    %759 = vsyncpa [#allocation5], 1
    %s760 = scalar_lea.sflag [#allocation5], 1
    %761 = vsyncpa %s760, 1
    %762 = vsyncpa [#allocation8], 1
    %s763 = scalar_lea.sflag [#allocation8], 1
    %764 = vsyncpa %s763, 1
    %765 = vsyncpa [#allocation6], 1
    %s766 = scalar_lea.sflag [#allocation6], 1
    %767 = vsyncpa %s766, 1

</llo_original>
